<compile_context>
chip_gen: v7x
topology: tpu7x:2x2x1
jax: 0.10.0
libtpu: 0.0.40
codegen_flags: <defaults>
</compile_context>

<pallas_src>
import functools
import math

import numpy as np

import jax
import jax.numpy as jnp
from jax import lax
from jax.experimental import pallas as pl
from jax.experimental.pallas import tpu as pltpu


def _round_up(x, m):
    return ((x + m - 1) // m) * m


def _pick_row_tile(n, d, o_pad, x_itemsize, out_itemsize, block_rows):
    """Row-tile size: VMEM-budgeted, multiple of 8, >= 2 grid steps when N allows."""
    # ~12 MiB budget keeps double-buffered tiles inside the smallest default scoped-VMEM
    # limit (v5e ~16 MiB; v6e/v7x default 32 MiB), so no vmem_limit_bytes override needed.
    vmem_budget = 12 * 1024 * 1024
    resident = 2 * d * o_pad * x_itemsize + 2 * o_pad * 4      # weights + bias buffers
    per_row = 2 * d * x_itemsize + 2 * o_pad * out_itemsize    # double-buffered X + out rows
    avail = max(vmem_budget - resident, 8 * per_row)
    tn = min(int(block_rows), int(avail // per_row))
    # Keep at least 2 grid steps when N is big enough so v7x megacore has work on both TCs.
    tn = min(tn, _round_up(-(-n // 2), 8))
    tn = min(tn, _round_up(n, 8))
    return max(8, (tn // 8) * 8)


def _ginv_linear_kernel(x_ref, wt_ref, bias_ref, o_ref):
    # Single MXU matmul per batch tile: (TN, D) @ (D, O_pad) -> (TN, O_pad), f32 accumulate.
    y = jnp.dot(x_ref[...], wt_ref[...], preferred_element_type=jnp.float32)
    o_ref[...] = (y + bias_ref[...]).astype(o_ref.dtype)  # bias (1, O_pad) broadcasts


@functools.partial(
    jax.jit, static_argnames=("block_rows", "out_dtype", "single_buffer_weights")
)
def ginvariant_forward(x, alphas, basis, bias, *, block_rows=2048,
                       out_dtype=jnp.float32, single_buffer_weights=False):
    """GInvariantLayer forward.

    x: (N, D); alphas: (O, B, 1) as in the module (or squeezed (O, B));
    basis: (B, D); bias: (O,). Returns (N, O) in `out_dtype` (f32 by default).
    """
    n, d = x.shape
    if alphas.ndim == 3:            # module parameter is (O, B, 1)
        alphas = alphas[..., 0]
    o, b = alphas.shape
    assert basis.shape == (b, d)
    assert bias.shape == (o,)

    # ---- Hoisted weight formation (tiny (B,D)x(O,B) contraction, done once) ----
    o_pad = _round_up(o, 128)  # lane-dense output width
    alphas_p = jnp.pad(alphas.astype(jnp.float32), ((0, o_pad - o), (0, 0)))
    # w_t[d, o] = sum_b basis[b, d] * alphas[o, b]  (pre-transposed: no `.T` in-kernel)
    w_t = lax.dot_general(
        basis.astype(jnp.float32), alphas_p,
        dimension_numbers=(((0,), (1,)), ((), ())),
        preferred_element_type=jnp.float32,
    )  # (D, O_pad)
    # Matmul operand dtype follows X (bf16 fast path only when X already arrives in bf16).
    w_t = w_t.astype(x.dtype)
    bias_p = jnp.pad(bias.astype(jnp.float32), (0, o_pad - o)).reshape(1, o_pad)

    # ---- Row tiling (no wrapper-side pad/cast of X; ragged last tile handled by Pallas) ----
    x_itemsize = jnp.dtype(x.dtype).itemsize
    out_itemsize = jnp.dtype(out_dtype).itemsize
    tn = _pick_row_tile(n, d, o_pad, x_itemsize, out_itemsize, block_rows)
    grid = (pl.cdiv(n, tn),)

    # Resident (constant-index) operands: optionally single-buffered to save VMEM at large D.
    resident_kwargs = {"pipeline_mode": pl.Buffered(1)} if single_buffer_weights else {}
    w_spec = pl.BlockSpec((d, o_pad), lambda i: (0, 0), **resident_kwargs)
    bias_spec = pl.BlockSpec((1, o_pad), lambda i: (0, 0), **resident_kwargs)

    out = pl.pallas_call(
        _ginv_linear_kernel,
        out_shape=jax.ShapeDtypeStruct((n, o_pad), out_dtype),
        grid=grid,
        in_specs=[
            pl.BlockSpec((tn, d), lambda i: (i, 0)),   # X tile, pipelined over rows
            w_spec,                                    # weights, resident
            bias_spec,                                 # bias, resident
        ],
        out_specs=pl.BlockSpec((tn, o_pad), lambda i: (i, 0)),
        compiler_params=pltpu.CompilerParams(
            # Independent row tiles -> megacore sharding on v7x, no-op on v5e/v6e.
            dimension_semantics=("parallel",),
        ),
        cost_estimate=pl.CostEstimate(
            flops=2 * n * d * o_pad,
            transcendentals=0,
            bytes_accessed=(
                n * d * x_itemsize            # X read once
                + d * o_pad * x_itemsize      # weights fetched once (resident)
                + o_pad * 4                   # bias
                + n * o_pad * out_itemsize    # output writeback
            ),
        ),
    )(x, w_t, bias_p)

    # Slice back to the logical O under jit (padded lanes are zero-weight columns + bias 0).
    return out[:, :o]


if __name__ == "__main__":
    # Small, deterministic synthetic setup (no file loads):
    batch = 8
    input_dim = 128      # "input_dim" of the module
    n_basis = 16         # basis.shape[0] (stand-in for subspace(input_dim) / rf-*.npy)
    output_dim = 32

    key = jax.random.PRNGKey(0)
    k_x, k_basis, k_alpha, k_x2 = jax.random.split(key, 4)

    x = jax.random.normal(k_x, (batch, input_dim), dtype=jnp.float32)
    basis = jax.random.normal(k_basis, (n_basis, input_dim), dtype=jnp.float32)
    # alphas ~ U(-stdv, stdv), stdv = 1/sqrt(output_dim), shaped (O, B, 1) like the module.
    stdv = 1.0 / math.sqrt(output_dim)
    alphas = jax.random.uniform(
        k_alpha, (output_dim, n_basis, 1), minval=-stdv, maxval=stdv, dtype=jnp.float32
    )
    bias = jnp.zeros((output_dim,), dtype=jnp.float32)

    # Float64 numpy reference mirroring the PyTorch double-precision forward.
    # (Kernel runs in f32 on the MXU, so compare at 1e-3 tolerances.)
    def ref_forward(xv):
        a64 = np.asarray(alphas, np.float64)                 # (O, B, 1)
        b64 = np.asarray(basis, np.float64)                  # (B, D)
        w64 = (a64 * b64[None, :, :]).sum(axis=-2)           # (O, D)
        return np.asarray(xv, np.float64) @ w64.T + np.asarray(bias, np.float64)[None, :]

    # Check 1: small batch (single tile).
    out = jax.block_until_ready(ginvariant_forward(x, alphas, basis, bias))
    assert out.shape == (batch, output_dim)
    assert np.allclose(np.asarray(out, np.float64), ref_forward(x),
                       atol=1e-3, rtol=1e-3), "mismatch vs reference"

    # Check 2: larger, non-divisible batch -> exercises multi-step row grid and the
    # ragged last tile (no wrapper-side padding of X) plus the O-pad / slice-back path.
    batch2 = 200
    x2 = jax.random.normal(k_x2, (batch2, input_dim), dtype=jnp.float32)
    out2 = jax.block_until_ready(
        ginvariant_forward(x2, alphas, basis, bias, block_rows=64)
    )
    assert out2.shape == (batch2, output_dim)
    assert np.allclose(np.asarray(out2, np.float64), ref_forward(x2),
                       atol=1e-3, rtol=1e-3), "mismatch vs reference (tiled/ragged)"

    print("KERNEL_OK")
</pallas_src>

<mosaic_0001>
module attributes {stable_mosaic.version = 11 : i64} {
  func.func @_ginv_linear_kernel(%arg0: i32, %arg1: memref<8x128xf32, #tpu.memory_space<vmem>>, %arg2: memref<128x128xf32, #tpu.memory_space<vmem>>, %arg3: memref<1x128xf32, #tpu.memory_space<vmem>>, %arg4: memref<8x128xf32, #tpu.memory_space<vmem>>) attributes {dimension_semantics = [#tpu.dimension_semantics<parallel>], iteration_bounds = array<i64: 1>, scalar_prefetch = 0 : i64, scratch_operands = 0 : i64, tpu.core_type = #tpu.core_type<tc>, window_params = [{transform_indices = @transform_0, window_bounds = array<i64: 8, 128>}, {pipeline_mode = #tpu.pipeline_mode<synchronous>, transform_indices = @transform_1, window_bounds = array<i64: 128, 128>}, {pipeline_mode = #tpu.pipeline_mode<synchronous>, transform_indices = @transform_2, window_bounds = array<i64: 1, 128>}, {transform_indices = @transform_3, window_bounds = array<i64: 8, 128>}]} {
    %c0 = arith.constant 0 : index
    %c0_0 = arith.constant 0 : index
    %0 = vector.load %arg1[%c0, %c0_0] : memref<8x128xf32, #tpu.memory_space<vmem>>, vector<8x128xf32>
    %c0_1 = arith.constant 0 : index
    %c0_2 = arith.constant 0 : index
    %1 = vector.load %arg2[%c0_1, %c0_2] : memref<128x128xf32, #tpu.memory_space<vmem>>, vector<128x128xf32>
    %cst = arith.constant dense<0.000000e+00> : vector<8x128xf32>
    %2 = tpu.matmul %0, %1, %cst {dimension_numbers = #tpu.dot_dimension_numbers<[1], [0], [0], [1], [0, 0, 1, 1], [], []>} : vector<8x128xf32>, vector<128x128xf32>, vector<8x128xf32> -> vector<8x128xf32>
    %c0_3 = arith.constant 0 : index
    %c0_4 = arith.constant 0 : index
    %3 = vector.load %arg3[%c0_3, %c0_4] : memref<1x128xf32, #tpu.memory_space<vmem>>, vector<1x128xf32>
    %4 = vector.broadcast %3 : vector<1x128xf32> to vector<8x128xf32>
    %5 = arith.addf %2, %4 : vector<8x128xf32>
    %c0_5 = arith.constant 0 : index
    %c0_6 = arith.constant 0 : index
    %6 = vector.load %arg4[%c0_5, %c0_6] : memref<8x128xf32, #tpu.memory_space<vmem>>, vector<8x128xf32>
    tpu.vector_store %arg4[%c0_5, %c0_6], %5 {strides = array<i32>} : memref<8x128xf32, #tpu.memory_space<vmem>>, vector<8x128xf32>,
    return
  }
  func.func @transform_0(%arg0: i32) -> (i32, i32) {
    %c0_i32 = arith.constant 0 : i32
    %c0_i32_0 = arith.constant 0 : i32
    return %arg0, %c0_i32 : i32, i32
  }
  func.func @transform_1(%arg0: i32) -> (i32, i32) {
    %c0_i32 = arith.constant 0 : i32
    %c0_i32_0 = arith.constant 0 : i32
    %c0_i32_1 = arith.constant 0 : i32
    return %c0_i32, %c0_i32_0 : i32, i32
  }
  func.func @transform_2(%arg0: i32) -> (i32, i32) {
    %c0_i32 = arith.constant 0 : i32
    %c0_i32_0 = arith.constant 0 : i32
    %c0_i32_1 = arith.constant 0 : i32
    return %c0_i32, %c0_i32_0 : i32, i32
  }
  func.func @transform_3(%arg0: i32) -> (i32, i32) {
    %c0_i32 = arith.constant 0 : i32
    %c0_i32_0 = arith.constant 0 : i32
    return %arg0, %c0_i32 : i32, i32
  }
}

</mosaic_0001>

<llo_original>
// kernel: ginvariant_forward.1
$region0: #{ginvariant_forward.1}
  #allocation0 [shape = 'u32[]', space=smem, size = 0x4, offset = 0x4, fixed_abs, tag = 'smem constant byte address 0x4 - core index']
  #allocation1 [shape = 'u32[144,128]{1,0:T(1,128)}', space=vmem, size = 0x12000, scoped, tag = 'internal scratch']
  %s0 = inlined_call_operand.vmem [shape: f32[8,128], index: 0, kind: input, shape index: {}]
  %s1 = inlined_call_operand.vmem [shape: f32[128,128], index: 1, kind: input, shape index: {}]
  %s2 = inlined_call_operand.vmem [shape: f32[1,128], index: 2, kind: input, shape index: {}]
  %s3 = inlined_call_operand.hbm [shape: f32[8,128], index: 3, kind: output, shape index: {}]
  %s4 = sld [smem:[#allocation0]]
  $region22: #{ginvariant_forward.1} parent=0
    _
  %s6 = ssub.s32 1, %s4
  %s7 = scalar_select 0, %s6, %s4
  $region1: #{ginvariant_forward.1} parent=0
    #allocation2 [shape = 'u8[4096]{0}', space=vmem, size = 0x1000, scoped, tag = 'output window, operand 0, single buffered']
    #allocation3 [shape = 's32[1]{0}', space=sflag, size = 0x4, scoped, tag = 'scoped memory for ginvariant_forward.1']
    %8 = vsyncpa [#allocation3], 0
    // Predicated region
    $region2: #{ginvariant_forward.1} parent=1 // pred_check
      _
    $region3: #{ginvariant_forward.1} parent=1 // pred_check_branch
      %10 = sbr.rel (0) target = $region5
    $region4: #{ginvariant_forward.1} parent=1 // pred_region
      _
    $region5: #{ginvariant_forward.1} parent=1 // pred_fallthru
      _
    // Predicated region
    $region6: #{ginvariant_forward.1} parent=1 // pred_check
      _
    $region7: #{ginvariant_forward.1} parent=1 // pred_check_branch
      %12 = sbr.rel (0) target = $region9
    $region8: #{ginvariant_forward.1} parent=1 // pred_region
      _
    $region9: #{ginvariant_forward.1} parent=1 // pred_fallthru
      _
    // Predicated region
    $region10: #{ginvariant_forward.1} parent=1 // pred_check
      _
    $region11: #{ginvariant_forward.1} parent=1 // pred_check_branch
      %14 = sbr.rel (0) target = $region13
    $region12: #{ginvariant_forward.1} parent=1 // pred_region
      _
    $region13: #{ginvariant_forward.1} parent=1 // pred_fallthru
      _
    %v15 = vld [vmem:[%s0] sm:$0xff]
    %v16 = vld [vmem:[%s1] sm:$0xff]
    %v17 = vld [vmem:[%s1 + $0x8] sm:$0xff]
    %v18 = vld [vmem:[%s1 + $0x10] sm:$0xff]
    %v19 = vld [vmem:[%s1 + $0x18] sm:$0xff]
    %v20 = vld [vmem:[%s1 + $0x20] sm:$0xff]
    %v21 = vld [vmem:[%s1 + $0x28] sm:$0xff]
    %v22 = vld [vmem:[%s1 + $0x30] sm:$0xff]
    %v23 = vld [vmem:[%s1 + $0x38] sm:$0xff]
    %v24 = vld [vmem:[%s1 + $0x40] sm:$0xff]
    %v25 = vld [vmem:[%s1 + $0x48] sm:$0xff]
    %v26 = vld [vmem:[%s1 + $0x50] sm:$0xff]
    %v27 = vld [vmem:[%s1 + $0x58] sm:$0xff]
    %v28 = vld [vmem:[%s1 + $0x60] sm:$0xff]
    %v29 = vld [vmem:[%s1 + $0x68] sm:$0xff]
    %v30 = vld [vmem:[%s1 + $0x70] sm:$0xff]
    %v31 = vld [vmem:[%s1 + $0x78] sm:$0xff]
    %v32 = vld [vmem:[%s2] sm:$0x1]
    %v34 = vlaneseq
    %v35 = vshrl.u32 %v34, 7
    %v36 = vsub.s32 0, %v35
    %v37 = vrot.slane %v32, %v36
    %39 = vmatprep.subr.mxu0 0.0
    %40 = vmatpush1.msra.mxu0 %v16
    %41 = vmatprep.subr.mxu0 0.0
    %42 = vmatpush1.msra.mxu0 %v17
    %43 = vmatprep.subr.mxu0 0.0
    %44 = vmatpush1.msra.mxu0 %v18
    %45 = vmatprep.subr.mxu0 0.0
    %46 = vmatpush1.msra.mxu0 %v19
    %47 = vmatprep.subr.mxu0 0.0
    %48 = vmatpush1.msra.mxu0 %v20
    %49 = vmatprep.subr.mxu0 0.0
    %50 = vmatpush1.msra.mxu0 %v21
    %51 = vmatprep.subr.mxu0 0.0
    %52 = vmatpush1.msra.mxu0 %v22
    %53 = vmatprep.subr.mxu0 0.0
    %54 = vmatpush1.msra.mxu0 %v23
    %55 = vmatprep.subr.mxu0 0.0
    %56 = vmatpush1.msra.mxu0 %v24
    %57 = vmatprep.subr.mxu0 0.0
    %58 = vmatpush1.msra.mxu0 %v25
    %59 = vmatprep.subr.mxu0 0.0
    %60 = vmatpush1.msra.mxu0 %v26
    %61 = vmatprep.subr.mxu0 0.0
    %62 = vmatpush1.msra.mxu0 %v27
    %63 = vmatprep.subr.mxu0 0.0
    %64 = vmatpush1.msra.mxu0 %v28
    %65 = vmatprep.subr.mxu0 0.0
    %66 = vmatpush1.msra.mxu0 %v29
    %67 = vmatprep.subr.mxu0 0.0
    %68 = vmatpush1.msra.mxu0 %v30
    %69 = vmatprep.subr.mxu0 0.0
    %70 = vmatpush1.msra.mxu0 %v31
    %71 = vmatprep.subr.mxu0 0.0
    %72 = vmatpush1.msra.mxu0 0.0
    %73 = vmatprep.subr.mxu0 0.0
    %74 = vmatpush1.msra.mxu0 0.0
    %75 = vmatprep.subr.mxu0 0.0
    %76 = vmatpush1.msra.mxu0 0.0
    %77 = vmatprep.subr.mxu0 0.0
    %78 = vmatpush1.msra.mxu0 0.0
    %79 = vmatprep.subr.mxu0 0.0
    %80 = vmatpush1.msra.mxu0 0.0
    %81 = vmatprep.subr.mxu0 0.0
    %82 = vmatpush1.msra.mxu0 0.0
    %83 = vmatprep.subr.mxu0 0.0
    %84 = vmatpush1.msra.mxu0 0.0
    %85 = vmatprep.subr.mxu0 0.0
    %86 = vmatpush1.msra.mxu0 0.0
    %87 = vmatprep.subr.mxu0 0.0
    %88 = vmatpush1.msra.mxu0 0.0
    %89 = vmatprep.subr.mxu0 0.0
    %90 = vmatpush1.msra.mxu0 0.0
    %91 = vmatprep.subr.mxu0 0.0
    %92 = vmatpush1.msra.mxu0 0.0
    %93 = vmatprep.subr.mxu0 0.0
    %94 = vmatpush1.msra.mxu0 0.0
    %95 = vmatprep.subr.mxu0 0.0
    %96 = vmatpush1.msra.mxu0 0.0
    %97 = vmatprep.subr.mxu0 0.0
    %98 = vmatpush1.msra.mxu0 0.0
    %99 = vmatprep.subr.mxu0 0.0
    %100 = vmatpush1.msra.mxu0 0.0
    %101 = vmatprep.subr.mxu0 0.0
    %102 = vmatpush1.msra.mxu0 0.0
    %103 = vmatprep.mubr.f32.mxu0 0.0
    %104 = vmatmul.mubr.f32.gmra.mrb[0].mxu0 %v15
    %v105 = vpop.f32.mrb[0].mxu0
    %v106 = vadd.f32 %v37, %v105
    %v107 = vpop.f32.mrb[0].mxu0
    %108 = vdwg.mxu0
    %109 = vst [vmem:[#allocation2] sm:$0xff] %v106
    // Predicated region
    $region14: #{ginvariant_forward.1} parent=1 // pred_check
      _
    $region15: #{ginvariant_forward.1} parent=1 // pred_check_branch
      %111 = sbr.rel (0) target = $region17
    $region16: #{ginvariant_forward.1} parent=1 // pred_region
      %s113 = ssub.s32 128, 128
      %114 = vsyncadd [#allocation3], %s113
      %s116 = sshll.u32 [#allocation2], 4
      %s117 = int_to_ptr.vmem [resolvable:$true] %s116
      %119 = dma.vmem_to_hbm [thread:$0]  %s117, 128, %s3, [#allocation3]
    $region17: #{ginvariant_forward.1} parent=1 // pred_fallthru
      _
    // Predicated region
    $region18: #{ginvariant_forward.1} parent=1 // pred_check
      _
    $region19: #{ginvariant_forward.1} parent=1 // pred_check_branch
      %121 = sbr.rel (0) target = $region21
    $region20: #{ginvariant_forward.1} parent=1 // pred_region
      %122 = dma.done [#allocation3], 128
    $region21: #{ginvariant_forward.1} parent=1 // pred_fallthru
      _
    %123 = vsyncpa [#allocation3], 1

</llo_original>
